<compile_context>
chip_gen: v7x
topology: tpu7x:2x2x1
jax: 0.10.0
libtpu: 0.0.40
codegen_flags: <defaults>
</compile_context>

<pallas_src>
import functools

import jax
import jax.numpy as jnp
from jax.experimental import pallas as pl
from jax.experimental.pallas import tpu as pltpu


def scaled_bernoulli_kernel(x_ref, w_ref, b_ref, l_ref, out_ref):
    # Matmul operands may be bf16; accumulate in f32 on the MXU, bias add in f32.
    logits = (
        jnp.dot(x_ref[...], w_ref[...], preferred_element_type=jnp.float32)
        + b_ref[...]
    )                                                  # (TB, OUT) f32

    # Numerically-stable softmax pieces (keep un-normalized e and denom).
    m = jnp.max(logits, axis=-1, keepdims=True)        # (TB, 1)
    e = jnp.exp(logits - m)                            # (TB, OUT)   EUP
    denom = jnp.sum(e, axis=-1, keepdims=True)         # (TB, 1)     XLU

    # log(1 - p) = log((denom - e) / denom) = log(denom - e) - log(denom).
    # Avoids the catastrophic cancellation of 1 - p and log(0) when p -> 1.
    log_denom = jnp.log(denom)                         # one log per row (cheap)
    log_1mp = jnp.log(denom - e) - log_denom           # (TB, OUT)   EUP

    # Scaled-Bernoulli probability: 1 - (1 - p)^l, exactly as in the reference.
    out = 1.0 - jnp.exp(l_ref[...] * log_1mp)          # (TB, OUT)   EUP
    out_ref[...] = out.astype(out_ref.dtype)


def _round_up(v, m):
    return ((v + m - 1) // m) * m


def scaled_bernoulli_probs(x, weight_t, bias, l, *, tile_b=256, use_bf16_matmul=True):
    """Compute ScaledBernoulliSL Bernoulli probs.

    Args:
      x:        (B, in_features)  float32
      weight_t: (in_features, out_features)  float32  (Linear weight, transposed)
      bias:     (out_features,)   float32
      l:        (B, 1) or (B,)    float32  per-sample scale factor
    Returns:
      probs:    (B, out_features) float32
    """
    x = jnp.asarray(x, jnp.float32)
    weight_t = jnp.asarray(weight_t, jnp.float32)
    bias = jnp.asarray(bias, jnp.float32)
    l = jnp.asarray(l, jnp.float32)
    if l.ndim == 1:
        l = l[:, None]

    B, IN = x.shape
    OUT = weight_t.shape[1]

    # ---- Pad OUT to a multiple of 128 for lane-dense output stores. ----------
    # Padded columns get a hugely negative bias so softmax gives them zero mass
    # (and zero output probability); they are sliced away at the end.
    OUT_pad = _round_up(OUT, 128)
    if OUT_pad != OUT:
        weight_t = jnp.pad(weight_t, ((0, 0), (0, OUT_pad - OUT)))
        bias = jnp.concatenate(
            [bias, jnp.full((OUT_pad - OUT,), -1e30, dtype=jnp.float32)]
        )
    bias2d = bias.reshape(1, OUT_pad)

    # ---- Choose tile_b: multiple of 8, no bigger than the (padded) batch, and
    #      shrunk until the VMEM working set fits a conservative (v7x-safe) budget.
    mm_dtype = jnp.bfloat16 if use_bf16_matmul else jnp.float32
    mm_bytes = jnp.dtype(mm_dtype).itemsize

    def vmem_bytes(tb):
        return (
            2 * tb * IN * mm_bytes          # double-buffered x tiles
            + 2 * IN * OUT_pad * mm_bytes   # resident weight (buffered)
            + 2 * OUT_pad * 4               # bias
            + 2 * tb * 4                    # l tiles
            + 2 * tb * OUT_pad * 4          # double-buffered output tiles
        )

    tile_b = _round_up(min(tile_b, _round_up(B, 8)), 8)
    while tile_b > 8 and vmem_bytes(tile_b) > (40 << 20):
        tile_b = max(8, _round_up(tile_b // 2, 8))

    # ---- Pad batch to a tile multiple (rows are independent). -----------------
    B_pad = _round_up(B, tile_b)
    if B_pad != B:
        x = jnp.pad(x, ((0, B_pad - B), (0, 0)))
        l = jnp.pad(l, ((0, B_pad - B), (0, 0)), constant_values=1.0)

    x_mm = x.astype(mm_dtype)
    w_mm = weight_t.astype(mm_dtype)

    vmem_limit = max(32 << 20, min(int(1.25 * vmem_bytes(tile_b)) + (2 << 20), 96 << 20))

    grid = (B_pad // tile_b,)
    out = pl.pallas_call(
        scaled_bernoulli_kernel,
        out_shape=jax.ShapeDtypeStruct((B_pad, OUT_pad), jnp.float32),
        grid_spec=pltpu.PrefetchScalarGridSpec(
            num_scalar_prefetch=0,
            grid=grid,
            in_specs=[
                pl.BlockSpec((tile_b, IN), lambda i: (i, 0)),    # x tile
                pl.BlockSpec((IN, OUT_pad), lambda i: (0, 0)),   # full weight (resident)
                pl.BlockSpec((1, OUT_pad), lambda i: (0, 0)),    # full bias
                pl.BlockSpec((tile_b, 1), lambda i: (i, 0)),     # l tile
            ],
            out_specs=pl.BlockSpec((tile_b, OUT_pad), lambda i: (i, 0)),
        ),
        compiler_params=pltpu.CompilerParams(
            dimension_semantics=("parallel",),
            vmem_limit_bytes=vmem_limit,
        ),
    )(x_mm, w_mm, bias2d, l)

    return out[:B, :OUT]


def _reference(x, weight_t, bias, l):
    logits = x @ weight_t + bias
    p = jax.nn.softmax(logits, axis=-1)
    return 1.0 - jnp.exp(l * jnp.log(1.0 - p))


if __name__ == "__main__":
    key = jax.random.PRNGKey(0)
    kx, kw, kb, kl = jax.random.split(key, 4)

    # Small shapes consistent with the module: batch=48, in_features=32, out=128.
    B, IN, OUT = 48, 32, 128
    bound = 1.0 / (IN ** 0.5)
    x = jax.random.normal(kx, (B, IN), dtype=jnp.float32)
    weight_t = jax.random.uniform(kw, (IN, OUT), minval=-bound, maxval=bound,
                                  dtype=jnp.float32)
    bias = jax.random.uniform(kb, (OUT,), minval=-bound, maxval=bound,
                              dtype=jnp.float32)
    l = jnp.exp(jax.random.normal(kl, (B, 1), dtype=jnp.float32) * 0.25)

    ref = _reference(x, weight_t, bias, l)

    # Default bf16-matmul path (loosened tolerance vs. f32 reference).
    probs = jax.block_until_ready(scaled_bernoulli_probs(x, weight_t, bias, l, tile_b=32))
    assert probs.shape == (B, OUT)
    assert jnp.allclose(probs, ref, atol=2e-3, rtol=5e-2)
    assert bool(jnp.all((probs >= 0.0) & (probs <= 1.0)))

    # f32 matmul path, tight tolerance.
    probs_f32 = jax.block_until_ready(
        scaled_bernoulli_probs(x, weight_t, bias, l, tile_b=32, use_bf16_matmul=False))
    assert jnp.allclose(probs_f32, ref, atol=1e-5, rtol=1e-5)

    # Non-128-multiple OUT and non-tile-multiple B (exercises lane + batch padding).
    B2, OUT2 = 20, 100
    x2 = jax.random.normal(kx, (B2, IN), dtype=jnp.float32)
    w2 = jax.random.uniform(kw, (IN, OUT2), minval=-bound, maxval=bound,
                            dtype=jnp.float32)
    b2 = jax.random.uniform(kb, (OUT2,), minval=-bound, maxval=bound,
                            dtype=jnp.float32)
    l2 = jnp.exp(jax.random.normal(kl, (B2, 1), dtype=jnp.float32) * 0.25)
    out2 = jax.block_until_ready(
        scaled_bernoulli_probs(x2, w2, b2, l2, use_bf16_matmul=False))
    assert out2.shape == (B2, OUT2)
    assert jnp.allclose(out2, _reference(x2, w2, b2, l2), atol=1e-5, rtol=1e-5)
    assert bool(jnp.all((out2 >= 0.0) & (out2 <= 1.0)))

    print("KERNEL_OK")
</pallas_src>

<mosaic_0001>
module attributes {stable_mosaic.version = 11 : i64} {
  func.func @scaled_bernoulli_kernel(%arg0: i32, %arg1: memref<32x32xbf16, #tpu.memory_space<vmem>>, %arg2: memref<32x128xbf16, #tpu.memory_space<vmem>>, %arg3: memref<1x128xf32, #tpu.memory_space<vmem>>, %arg4: memref<32x1xf32, #tpu.memory_space<vmem>>, %arg5: memref<32x128xf32, #tpu.memory_space<vmem>>) attributes {dimension_semantics = [#tpu.dimension_semantics<parallel>], iteration_bounds = array<i64: 2>, scalar_prefetch = 0 : i64, scratch_operands = 0 : i64, tpu.core_type = #tpu.core_type<tc>, window_params = [{transform_indices = @transform_0, window_bounds = array<i64: 32, 32>}, {pipeline_mode = #tpu.pipeline_mode<synchronous>, transform_indices = @transform_1, window_bounds = array<i64: 32, 128>}, {pipeline_mode = #tpu.pipeline_mode<synchronous>, transform_indices = @transform_2, window_bounds = array<i64: 1, 128>}, {transform_indices = @transform_3, window_bounds = array<i64: 32, 1>}, {transform_indices = @transform_4, window_bounds = array<i64: 32, 128>}]} {
    %c0 = arith.constant 0 : index
    %c0_0 = arith.constant 0 : index
    %0 = vector.load %arg1[%c0, %c0_0] : memref<32x32xbf16, #tpu.memory_space<vmem>>, vector<32x32xbf16>
    %c0_1 = arith.constant 0 : index
    %c0_2 = arith.constant 0 : index
    %1 = vector.load %arg2[%c0_1, %c0_2] : memref<32x128xbf16, #tpu.memory_space<vmem>>, vector<32x128xbf16>
    %cst = arith.constant dense<0.000000e+00> : vector<32x128xf32>
    %2 = tpu.matmul %0, %1, %cst {dimension_numbers = #tpu.dot_dimension_numbers<[1], [0], [0], [1], [0, 0, 1, 1], [], []>} : vector<32x32xbf16>, vector<32x128xbf16>, vector<32x128xf32> -> vector<32x128xf32>
    %c0_3 = arith.constant 0 : index
    %c0_4 = arith.constant 0 : index
    %3 = vector.load %arg3[%c0_3, %c0_4] : memref<1x128xf32, #tpu.memory_space<vmem>>, vector<1x128xf32>
    %4 = vector.broadcast %3 : vector<1x128xf32> to vector<32x128xf32>
    %5 = arith.addf %2, %4 : vector<32x128xf32>
    %cst_5 = arith.constant dense<0xFF800000> : vector<32xf32>
    %6 = vector.multi_reduction <maximumf>, %5, %cst_5 [1] : vector<32x128xf32> to vector<32xf32>
    %7 = vector.shape_cast %6 : vector<32xf32> to vector<32x1xf32>
    %8 = vector.broadcast %7 : vector<32x1xf32> to vector<32x128xf32>
    %9 = arith.subf %5, %8 : vector<32x128xf32>
    %10 = math.exp %9 : vector<32x128xf32>
    %cst_6 = arith.constant dense<0.000000e+00> : vector<32xf32>
    %11 = vector.multi_reduction <add>, %10, %cst_6 [1] : vector<32x128xf32> to vector<32xf32>
    %12 = vector.shape_cast %11 : vector<32xf32> to vector<32x1xf32>
    %13 = math.log %12 : vector<32x1xf32>
    %14 = vector.broadcast %12 : vector<32x1xf32> to vector<32x128xf32>
    %15 = arith.subf %14, %10 : vector<32x128xf32>
    %16 = math.log %15 : vector<32x128xf32>
    %17 = vector.broadcast %13 : vector<32x1xf32> to vector<32x128xf32>
    %18 = arith.subf %16, %17 : vector<32x128xf32>
    %c0_7 = arith.constant 0 : index
    %c0_8 = arith.constant 0 : index
    %19 = vector.load %arg4[%c0_7, %c0_8] : memref<32x1xf32, #tpu.memory_space<vmem>>, vector<32x1xf32>
    %20 = vector.broadcast %19 : vector<32x1xf32> to vector<32x128xf32>
    %21 = arith.mulf %20, %18 : vector<32x128xf32>
    %22 = math.exp %21 : vector<32x128xf32>
    %cst_9 = arith.constant 1.000000e+00 : f32
    %23 = vector.broadcast %cst_9 : f32 to vector<32x128xf32>
    %24 = arith.subf %23, %22 : vector<32x128xf32>
    %c0_10 = arith.constant 0 : index
    %c0_11 = arith.constant 0 : index
    %25 = vector.load %arg5[%c0_10, %c0_11] : memref<32x128xf32, #tpu.memory_space<vmem>>, vector<32x128xf32>
    tpu.vector_store %arg5[%c0_10, %c0_11], %24 {strides = array<i32>} : memref<32x128xf32, #tpu.memory_space<vmem>>, vector<32x128xf32>,
    return
  }
  func.func @transform_0(%arg0: i32) -> (i32, i32) {
    %c0_i32 = arith.constant 0 : i32
    %c0_i32_0 = arith.constant 0 : i32
    return %arg0, %c0_i32 : i32, i32
  }
  func.func @transform_1(%arg0: i32) -> (i32, i32) {
    %c0_i32 = arith.constant 0 : i32
    %c0_i32_0 = arith.constant 0 : i32
    %c0_i32_1 = arith.constant 0 : i32
    return %c0_i32, %c0_i32_0 : i32, i32
  }
  func.func @transform_2(%arg0: i32) -> (i32, i32) {
    %c0_i32 = arith.constant 0 : i32
    %c0_i32_0 = arith.constant 0 : i32
    %c0_i32_1 = arith.constant 0 : i32
    return %c0_i32, %c0_i32_0 : i32, i32
  }
  func.func @transform_3(%arg0: i32) -> (i32, i32) {
    %c0_i32 = arith.constant 0 : i32
    %c0_i32_0 = arith.constant 0 : i32
    return %arg0, %c0_i32 : i32, i32
  }
  func.func @transform_4(%arg0: i32) -> (i32, i32) {
    %c0_i32 = arith.constant 0 : i32
    %c0_i32_0 = arith.constant 0 : i32
    return %arg0, %c0_i32 : i32, i32
  }
}

</mosaic_0001>

<llo_original>
// kernel: tpu_custom_call.1
$region0: #{tpu_custom_call.1}
  #allocation0 [shape = 'u32[]', space=smem, size = 0x4, offset = 0x4, fixed_abs, tag = 'smem constant byte address 0x4 - core index']
  #allocation1 [shape = 'u32[144,128]{1,0:T(1,128)}', space=vmem, size = 0x12000, scoped, tag = 'internal scratch']
  %s0 = inlined_call_operand.vmem [shape: bf16[64,32], index: 0, kind: input, shape index: {}]
  %s1 = inlined_call_operand.vmem [shape: bf16[32,128], index: 1, kind: input, shape index: {}]
  %s2 = inlined_call_operand.vmem [shape: f32[1,128], index: 2, kind: input, shape index: {}]
  %s3 = inlined_call_operand.vmem [shape: f32[64,1], index: 3, kind: input, shape index: {}]
  %s4 = inlined_call_operand.hbm [shape: f32[64,128], index: 4, kind: output, shape index: {}]
  %s5 = sld [smem:[#allocation0]]
  $region49: #{tpu_custom_call.1} parent=0
    _
  %s7 = ssub.s32 1, %s5
  %s8 = scalar_select 0, %s7, %s5
  $region1: #{tpu_custom_call.1} parent=0
    #allocation2 [shape = 'u8[32768]{0}', space=vmem, size = 0x8000, scoped, tag = 'output window, operand 0']
    #allocation3 [shape = 's32[2]{0}', space=sflag, size = 0x8, scoped, tag = 'scoped memory for tpu_custom_call.1']
    %9 = vsyncpa [#allocation3], 0
    %s10 = scalar_lea.sflag [#allocation3], 1
    %11 = vsyncpa %s10, 0
    loop: start=0, step=1, limit=4
    $region2: #{tpu_custom_call.1} parent=1 // loop_pre_header
      _
    $region3: #{tpu_custom_call.1} parent=1 // loop_header
      %s13 = sphi 0, %s17
      %p14 = scmp.ge.s32.totalorder %s13, 4
      %s23 = sphi 0, %s25
      %s26 = sphi 0, %s23
      %s27 = sphi 0, %s26
      %s43 = sphi 0, %s27
      %s47 = sphi 0, %s47
      %s49 = sphi 0, %s47
      %s50 = sphi 0, %s49
      %s64 = sphi 0, %s50
      %s68 = sphi 0, %s68
      %s70 = sphi 0, %s68
      %s71 = sphi 0, %s70
      %s85 = sphi 0, %s71
      %s91 = sphi 0, %s93
      %s94 = sphi 0, %s91
      %s95 = sphi 0, %s94
      %s111 = sphi 0, %s95
      %s117 = sphi 0, %s119
      %s120 = sphi 0, %s117
      %s121 = sphi 0, %s120
      %s137 = sphi 0, %s121
    $region4: #{tpu_custom_call.1} parent=1 // loop_header_branch
      %16 = sbr.rel (%p14) target = $region8
    $region5: #{tpu_custom_call.1} parent=1 // loop_body
      %s18 = ssub.s32 %s13, 1
      %s19 = ssub.s32 %s13, 2
      %s20 = sadd.s32 %s13, 1
      %s21 = ssub.s32 %s13, %s20
      %p22 = scmp.eq.s32.totalorder %s21, 0
      %s24 = sadd.s32 %s23, 1
      %s25 = scalar_select %p22, %s23, %s24
      %p28 = pneg %p22
      %p29 = scmp.eq.s32.totalorder %s13, 1
      %p30 = por %p28, %p29
      %p31 = scmp.ne.s32.totalorder %s23, %s26
      %p32 = scmp.eq.s32.totalorder %s13, 0
      %p33 = por %p31, %p32
      %p34 = scmp.ne.s32.totalorder %s23, %s26
      %p35 = scmp.eq.s32.totalorder %s18, 1
      %p36 = por %p34, %p35
      %p37 = scmp.ne.s32.totalorder %s26, %s27
      %p38 = scmp.eq.s32.totalorder %s18, 0
      %p39 = por %p37, %p38
      %p40 = scmp.ne.s32.totalorder %s26, %s27
      %p41 = scmp.eq.s32.totalorder %s19, 1
      %p42 = por %p40, %p41
      %p44 = scmp.ne.s32.totalorder %s27, %s43
      %p45 = scmp.eq.s32.totalorder %s19, 0
      %p46 = por %p44, %p45
      %s48 = sadd.s32 %s47, 1
      %p51 = scmp.eq.s32.totalorder %s13, 1
      %p52 = scmp.ne.s32.totalorder %s47, %s49
      %p53 = scmp.eq.s32.totalorder %s13, 0
      %p54 = por %p52, %p53
      %p55 = scmp.ne.s32.totalorder %s47, %s49
      %p56 = scmp.eq.s32.totalorder %s18, 1
      %p57 = por %p55, %p56
      %p58 = scmp.ne.s32.totalorder %s49, %s50
      %p59 = scmp.eq.s32.totalorder %s18, 0
      %p60 = por %p58, %p59
      %p61 = scmp.ne.s32.totalorder %s49, %s50
      %p62 = scmp.eq.s32.totalorder %s19, 1
      %p63 = por %p61, %p62
      %p65 = scmp.ne.s32.totalorder %s50, %s64
      %p66 = scmp.eq.s32.totalorder %s19, 0
      %p67 = por %p65, %p66
      %s69 = sadd.s32 %s68, 1
      %p72 = scmp.eq.s32.totalorder %s13, 1
      %p73 = scmp.ne.s32.totalorder %s68, %s70
      %p74 = scmp.eq.s32.totalorder %s13, 0
      %p75 = por %p73, %p74
      %p76 = scmp.ne.s32.totalorder %s68, %s70
      %p77 = scmp.eq.s32.totalorder %s18, 1
      %p78 = por %p76, %p77
      %p79 = scmp.ne.s32.totalorder %s70, %s71
      %p80 = scmp.eq.s32.totalorder %s18, 0
      %p81 = por %p79, %p80
      %p82 = scmp.ne.s32.totalorder %s70, %s71
      %p83 = scmp.eq.s32.totalorder %s19, 1
      %p84 = por %p82, %p83
      %p86 = scmp.ne.s32.totalorder %s71, %s85
      %p87 = scmp.eq.s32.totalorder %s19, 0
      %p88 = por %p86, %p87
      %s89 = ssub.s32 %s13, %s20
      %p90 = scmp.eq.s32.totalorder %s89, 0
      %s92 = sadd.s32 %s91, 1
      %s93 = scalar_select %p90, %s91, %s92
      %p96 = pneg %p90
      %p97 = scmp.eq.s32.totalorder %s13, 1
      %p98 = por %p96, %p97
      %p99 = scmp.ne.s32.totalorder %s91, %s94
      %p100 = scmp.eq.s32.totalorder %s13, 0
      %p101 = por %p99, %p100
      %p102 = scmp.ne.s32.totalorder %s91, %s94
      %p103 = scmp.eq.s32.totalorder %s18, 1
      %p104 = por %p102, %p103
      %p105 = scmp.ne.s32.totalorder %s94, %s95
      %p106 = scmp.eq.s32.totalorder %s18, 0
      %p107 = por %p105, %p106
      %p108 = scmp.ne.s32.totalorder %s94, %s95
      %p109 = scmp.eq.s32.totalorder %s19, 1
      %p110 = por %p108, %p109
      %p112 = scmp.ne.s32.totalorder %s95, %s111
      %p113 = scmp.eq.s32.totalorder %s19, 0
      %p114 = por %p112, %p113
      %s115 = ssub.s32 %s13, %s20
      %p116 = scmp.eq.s32.totalorder %s115, 0
      %s118 = sadd.s32 %s117, 1
      %s119 = scalar_select %p116, %s117, %s118
      %p122 = pneg %p116
      %p123 = scmp.eq.s32.totalorder %s13, 1
      %p124 = por %p122, %p123
      %p125 = scmp.ne.s32.totalorder %s117, %s120
      %p126 = scmp.eq.s32.totalorder %s13, 0
      %p127 = por %p125, %p126
      %p128 = scmp.ne.s32.totalorder %s117, %s120
      %p129 = scmp.eq.s32.totalorder %s18, 1
      %p130 = por %p128, %p129
      %p131 = scmp.ne.s32.totalorder %s120, %s121
      %p132 = scmp.eq.s32.totalorder %s18, 0
      %p133 = por %p131, %p132
      %p134 = scmp.ne.s32.totalorder %s120, %s121
      %p135 = scmp.eq.s32.totalorder %s19, 1
      %p136 = por %p134, %p135
      %p138 = scmp.ne.s32.totalorder %s121, %s137
      %p139 = scmp.eq.s32.totalorder %s19, 0
      %p140 = por %p138, %p139
      %p141 = scmp.le.s32.totalorder 1, %s13
      %p142 = scmp.lt.s32.totalorder %s13, 3
      %p143 = pnand %p141, %p142
      %p144 = pneg %p143
      // Predicated region
      $region9: #{tpu_custom_call.1} parent=5 // pred_check
        _
      $region10: #{tpu_custom_call.1} parent=5 // pred_check_branch
        %146 = sbr.rel (%p143) target = $region12
      $region11: #{tpu_custom_call.1} parent=5 // pred_region
        %s147 = ssub.s32 %s13, 1
        // Predicated region
        $region13: #{tpu_custom_call.1} parent=11 // pred_check
          %p148 = pneg %p60
        $region14: #{tpu_custom_call.1} parent=11 // pred_check_branch
          %150 = sbr.rel (%p148) target = $region16
        $region15: #{tpu_custom_call.1} parent=11 // pred_region
          _
        $region16: #{tpu_custom_call.1} parent=11 // pred_fallthru
          _
        // Predicated region
        $region17: #{tpu_custom_call.1} parent=11 // pred_check
          %p151 = pneg %p81
        $region18: #{tpu_custom_call.1} parent=11 // pred_check_branch
          %153 = sbr.rel (%p151) target = $region20
        $region19: #{tpu_custom_call.1} parent=11 // pred_region
          _
        $region20: #{tpu_custom_call.1} parent=11 // pred_fallthru
          _
      $region12: #{tpu_custom_call.1} parent=5 // pred_fallthru
        _
      %p154 = scmp.lt.s32.totalorder %s13, 2
      // Predicated region
      $region21: #{tpu_custom_call.1} parent=5 // pred_check
        %p155 = pneg %p154
      $region22: #{tpu_custom_call.1} parent=5 // pred_check_branch
        %157 = sbr.rel (%p155) target = $region24
      $region23: #{tpu_custom_call.1} parent=5 // pred_region
        // Predicated region
        $region25: #{tpu_custom_call.1} parent=23 // pred_check
          %p158 = pneg %p33
        $region26: #{tpu_custom_call.1} parent=23 // pred_check_branch
          %160 = sbr.rel (%p158) target = $region28
        $region27: #{tpu_custom_call.1} parent=23 // pred_region
          %s161 = smul.u32 4, %s13
          %p162 = scmp.lt.s32.totalorder %s161, 7
          %s163 = scalar_select %p162, %s161, 7
          %s164 = smul.addr %s163, 4
          %s165 = scalar_lea.vmem %s0, %s164
          %s166 = smul.u32 4, %s13
        $region28: #{tpu_custom_call.1} parent=23 // pred_fallthru
          _
        // Predicated region
        $region29: #{tpu_custom_call.1} parent=23 // pred_check
          %p167 = pneg %p101
        $region30: #{tpu_custom_call.1} parent=23 // pred_check_branch
          %169 = sbr.rel (%p167) target = $region32
        $region31: #{tpu_custom_call.1} parent=23 // pred_region
          %s170 = smul.u32 4, %s13
          %p171 = scmp.lt.s32.totalorder %s170, 7
          %s172 = scalar_select %p171, %s170, 7
          %s173 = smul.addr %s172, 8
          %s174 = scalar_lea.vmem %s3, %s173
          %s175 = smul.u32 4, %s13
        $region32: #{tpu_custom_call.1} parent=23 // pred_fallthru
          _
      $region24: #{tpu_custom_call.1} parent=5 // pred_fallthru
        _
      %p176 = scmp.le.s32.totalorder 1, %s13
      %p177 = scmp.lt.s32.totalorder %s13, 3
      %p178 = pnand %p176, %p177
      %p179 = pneg %p178
      // Predicated region
      $region33: #{tpu_custom_call.1} parent=5 // pred_check
        _
      $region34: #{tpu_custom_call.1} parent=5 // pred_check_branch
        %181 = sbr.rel (%p178) target = $region36
      $region35: #{tpu_custom_call.1} parent=5 // pred_region
        %s182 = ssub.s32 %s13, 1
        %s183 = smul.u32 4, %s18
        %p184 = scmp.lt.s32.totalorder %s183, 7
        %s185 = scalar_select %p184, %s183, 7
        %s186 = smul.addr %s185, 4
        %s187 = scalar_lea.vmem %s0, %s186
        %p188 = pneg %p39
        %p189 = pneg %p36
        %p190 = pneg %p60
        %p191 = pneg %p57
        %p192 = pneg %p81
        %p193 = pneg %p78
        %s194 = smul.u32 4, %s18
        %p195 = scmp.lt.s32.totalorder %s194, 7
        %s196 = scalar_select %p195, %s194, 7
        %s197 = smul.addr %s196, 8
        %s198 = scalar_lea.vmem %s3, %s197
        %p199 = pneg %p107
        %p200 = pneg %p104
        %p201 = pneg %p133
        %p202 = pneg %p130
        %s203 = sand.u32 %s120, 1
        %s204 = scalar_lea.sflag [#allocation3], %s203
        %s205 = sand.u32 %s120, 1
        %s206 = smul.addr %s205, 32
        %s207 = scalar_lea.vmem [#allocation2], %s206
        %s208 = smul.u32 4, %s18
        %p209 = scmp.lt.s32.totalorder %s208, 7
        %s210 = scalar_select %p209, %s208, 7
        %s211 = smul.addr %s210, 4
        %s212 = scalar_lea.vmem %s0, %s211
        %s213 = smul.u32 4, %s18
        %s214 = smul.u32 4, %s18
        %p215 = scmp.lt.s32.totalorder %s214, 7
        %s216 = scalar_select %p215, %s214, 7
        %s217 = smul.addr %s216, 8
        %s218 = scalar_lea.vmem %s3, %s217
        %s219 = smul.u32 4, %s18
        %s220 = smul.u32 4, %s18
        %v222 = vld [vmem:[%s212] sm:$0xf]
        %v223 = vld [vmem:[%s212 + $0x4] sm:$0xf]
        %v224 = vld [vmem:[%s212 + $0x8] sm:$0xf]
        %v225 = vld [vmem:[%s212 + $0xc] sm:$0xf]
        %v226 = vld [vmem:[%s1] sm:$0xf]
        %v227 = vld [vmem:[%s1 + $0x4] sm:$0xf]
        %v228 = vld [vmem:[%s1 + $0x8] sm:$0xf]
        %v229 = vld [vmem:[%s1 + $0xc] sm:$0xf]
        %v230 = vld [vmem:[%s2] sm:$0x1]
        %v232 = vlaneseq
        %v233 = vshrl.u32 %v232, 7
        %v234 = vsub.s32 0, %v233
        %v235 = vrot.slane %v230, %v234
        %v241 = vunpack.c.l.b16 %v222
        %v242 = vunpack.c.l.b16 %v223
        %v243 = vunpack.c.l.b16 %v224
        %v244 = vunpack.c.l.b16 %v225
        %v245 = vpack.c.b16 %v242, %v241
        %v246 = vpack.c.b16 %v244, %v243
        %v251 = vunpack.c.l.b16 %v226
        %v252 = vunpack.c.l.b16 %v227
        %v253 = vunpack.c.l.b16 %v228
        %v254 = vunpack.c.l.b16 %v229
        %v255 = vpack.c.b16 %v252, %v251
        %v256 = vpack.c.b16 %v254, %v253
        %vm259 = vcmask 261120
        %v261 = vsel %vm259, %v245, 0
        %v264 = vsel %vm259, %v246, 0
        %266 = vmatprep.subr.bf16.mxu0 0
        %267 = vmatpush1.bf16.msra.mxu0 %v255
        %268 = vmatprep.subr.bf16.mxu0 0
        %269 = vmatpush1.bf16.msra.mxu0 %v256
        %270 = vmatprep.subr.bf16.mxu0 0
        %271 = vmatpush1.bf16.msra.mxu0 0
        %272 = vmatprep.subr.bf16.mxu0 0
        %273 = vmatpush1.bf16.msra.mxu0 0
        %274 = vmatprep.subr.bf16.mxu0 0
        %275 = vmatpush1.bf16.msra.mxu0 0
        %276 = vmatprep.subr.bf16.mxu0 0
        %277 = vmatpush1.bf16.msra.mxu0 0
        %278 = vmatprep.subr.bf16.mxu0 0
        %279 = vmatpush1.bf16.msra.mxu0 0
        %280 = vmatprep.subr.bf16.mxu0 0
        %281 = vmatpush1.bf16.msra.mxu0 0
        %282 = vmatprep.subr.bf16.mxu0 0
        %283 = vmatpush1.bf16.msra.mxu0 0
        %284 = vmatprep.subr.bf16.mxu0 0
        %285 = vmatpush1.bf16.msra.mxu0 0
        %286 = vmatprep.subr.bf16.mxu0 0
        %287 = vmatpush1.bf16.msra.mxu0 0
        %288 = vmatprep.subr.bf16.mxu0 0
        %289 = vmatpush1.bf16.msra.mxu0 0
        %290 = vmatprep.subr.bf16.mxu0 0
        %291 = vmatpush1.bf16.msra.mxu0 0
        %292 = vmatprep.subr.bf16.mxu0 0
        %293 = vmatpush1.bf16.msra.mxu0 0
        %294 = vmatprep.subr.bf16.mxu0 0
        %295 = vmatpush1.bf16.msra.mxu0 0
        %296 = vmatprep.subr.bf16.mxu0 0
        %297 = vmatpush1.bf16.msra.mxu0 0
        %298 = vmatprep.mubr.bf16.mxu0 0
        %299 = vmatmul.mubr.bf16.gmra.mrb[0].mxu0 %v261
        %v300 = vpop.f32.mrb[0].mxu0
        %v301 = vadd.f32 %v235, %v300
        %v302 = vpop.f32.mrb[0].mxu0
        %v303 = vpop.f32.mrb[0].mxu0
        %v304 = vadd.f32 %v235, %v303
        %v305 = vpop.f32.mrb[0].mxu0
        %306 = vmatprep.mubr.bf16.mxu0 0
        %307 = vmatmul.mubr.bf16.gmra.mrb[0].mxu0 %v264
        %v308 = vpop.f32.mrb[0].mxu0
        %v309 = vadd.f32 %v235, %v308
        %v310 = vpop.f32.mrb[0].mxu0
        %v311 = vpop.f32.mrb[0].mxu0
        %v312 = vadd.f32 %v235, %v311
        %v313 = vpop.f32.mrb[0].mxu0
        %314 = vdwg.mxu0
        %315 = vmax.xlane.f32.xlu0 %v301
        %v316 = vpop.xlane.xlu0 %315
        %317 = vmax.xlane.f32.xlu0 %v304
        %v318 = vpop.xlane.xlu0 %317
        %319 = vmax.xlane.f32.xlu0 %v309
        %v320 = vpop.xlane.xlu0 %319
        %321 = vmax.xlane.f32.xlu0 %v312
        %v322 = vpop.xlane.xlu0 %321
        %v323 = vsub.f32 %v301, %v316
        %v324 = vsub.f32 %v304, %v318
        %v325 = vsub.f32 %v309, %v320
        %v326 = vsub.f32 %v312, %v322
        %v327 = vmul.f32 %v323, 1.442695
        %v328 = vpow.pop %v327
        %v329 = vmul.f32 %v324, 1.442695
        %v330 = vpow.pop %v329
        %v331 = vmul.f32 %v325, 1.442695
        %v332 = vpow.pop %v331
        %v333 = vmul.f32 %v326, 1.442695
        %v334 = vpow.pop %v333
        %335 = vadd.xlane.f32.xlu0 %v328
        %v336 = vpop.xlane.xlu0 %335
        %337 = vadd.xlane.f32.xlu0 %v330
        %v338 = vpop.xlane.xlu0 %337
        %339 = vadd.xlane.f32.xlu0 %v332
        %v340 = vpop.xlane.xlu0 %339
        %341 = vadd.xlane.f32.xlu0 %v334
        %v342 = vpop.xlane.xlu0 %341
        %v343 = vlog2.pop %v336
        %v344 = vmul.f32 %v343, 0.6931472
        %v345 = vlog2.pop %v338
        %v346 = vmul.f32 %v345, 0.6931472
        %v347 = vlog2.pop %v340
        %v348 = vmul.f32 %v347, 0.6931472
        %v349 = vlog2.pop %v342
        %v350 = vmul.f32 %v349, 0.6931472
        %v351 = vsub.f32 %v336, %v328
        %v352 = vsub.f32 %v338, %v330
        %v353 = vsub.f32 %v340, %v332
        %v354 = vsub.f32 %v342, %v334
        %v355 = vlog2.pop %v351
        %v356 = vmul.f32 %v355, 0.6931472
        %v357 = vlog2.pop %v352
        %v358 = vmul.f32 %v357, 0.6931472
        %v359 = vlog2.pop %v353
        %v360 = vmul.f32 %v359, 0.6931472
        %v361 = vlog2.pop %v354
        %v362 = vmul.f32 %v361, 0.6931472
        %v363 = vsub.f32 %v356, %v344
        %v364 = vsub.f32 %v358, %v346
        %v365 = vsub.f32 %v360, %v348
        %v366 = vsub.f32 %v362, %v350
        %v367 = vld [vmem:[%s218] sm:$0xff]
        %v368 = vld [vmem:[%s218 + $0x8] sm:$0xff]
        %v369 = vld [vmem:[%s218 + $0x10] sm:$0xff]
        %v370 = vld [vmem:[%s218 + $0x18] sm:$0xff]
        %372 = vset.pattern.permute.xlu0 0
        %373 = vperm.xlu0 %372, %v367
        %v374 = vpop.permute.xlu0 %373
        %377 = vset.pattern.permute.xlu0 0
        %378 = vperm.xlu0 %377, %v368
        %v379 = vpop.permute.xlu0 %378
        %382 = vset.pattern.permute.xlu0 0
        %383 = vperm.xlu0 %382, %v369
        %v384 = vpop.permute.xlu0 %383
        %387 = vset.pattern.permute.xlu0 0
        %388 = vperm.xlu0 %387, %v370
        %v389 = vpop.permute.xlu0 %388
        %v391 = vmul.f32 %v374, %v363
        %v392 = vmul.f32 %v379, %v364
        %v393 = vmul.f32 %v384, %v365
        %v394 = vmul.f32 %v389, %v366
        %v395 = vmul.f32 %v391, 1.442695
        %v396 = vpow.pop %v395
        %v397 = vmul.f32 %v392, 1.442695
        %v398 = vpow.pop %v397
        %v399 = vmul.f32 %v393, 1.442695
        %v400 = vpow.pop %v399
        %v401 = vmul.f32 %v394, 1.442695
        %v402 = vpow.pop %v401
        %v403 = vsub.f32 1.0, %v396
        %v404 = vsub.f32 1.0, %v398
        %v405 = vsub.f32 1.0, %v400
        %v406 = vsub.f32 1.0, %v402
        %407 = vst [vmem:[%s207] sm:$0xff] %v403
        %408 = vst [vmem:[%s207 + $0x8] sm:$0xff] %v404
        %409 = vst [vmem:[%s207 + $0x10] sm:$0xff] %v405
        %410 = vst [vmem:[%s207 + $0x18] sm:$0xff] %v406
        %s411 = sand.u32 %s120, 1
        %s412 = scalar_lea.sflag [#allocation3], %s411
        %s413 = sand.u32 %s120, 1
        %s414 = smul.addr %s413, 32
        %s415 = scalar_lea.vmem [#allocation2], %s414
        // Predicated region
        $region37: #{tpu_custom_call.1} parent=35 // pred_check
          %p416 = pneg %p130
        $region38: #{tpu_custom_call.1} parent=35 // pred_check_branch
          %418 = sbr.rel (%p416) target = $region40
        $region39: #{tpu_custom_call.1} parent=35 // pred_region
          %s419 = smul.u32 4, %s18
          %s421 = ssub.s32 512, 512
          %422 = vsyncadd %s412, %s421
          %s423 = smul.addr %s419, 128
          %s424 = scalar_lea.hbm %s4, %s423
          %s425 = sshll.u32 %s415, 4
          %s426 = int_to_ptr.vmem [resolvable:$true] %s425
          %431 = dma.vmem_to_hbm [thread:$0]  %s426, 512, %s424, %s412, 128, 128, 8
        $region40: #{tpu_custom_call.1} parent=35 // pred_fallthru
          _
      $region36: #{tpu_custom_call.1} parent=5 // pred_fallthru
        _
      %p432 = scmp.le.s32.totalorder 2, %s13
      // Predicated region
      $region41: #{tpu_custom_call.1} parent=5 // pred_check
        %p433 = pneg %p432
      $region42: #{tpu_custom_call.1} parent=5 // pred_check_branch
        %435 = sbr.rel (%p433) target = $region44
      $region43: #{tpu_custom_call.1} parent=5 // pred_region
        %s436 = ssub.s32 %s13, 2
        // Predicated region
        $region45: #{tpu_custom_call.1} parent=43 // pred_check
          %p437 = pneg %p136
        $region46: #{tpu_custom_call.1} parent=43 // pred_check_branch
          %439 = sbr.rel (%p437) target = $region48
        $region47: #{tpu_custom_call.1} parent=43 // pred_region
          %s440 = sand.u32 %s121, 1
          %s441 = scalar_lea.sflag [#allocation3], %s440
          %s442 = sand.u32 %s121, 1
          %s443 = smul.addr %s442, 32
          %s444 = scalar_lea.vmem [#allocation2], %s443
          %445 = dma.done %s441, 512
        $region48: #{tpu_custom_call.1} parent=43 // pred_fallthru
          _
      $region44: #{tpu_custom_call.1} parent=5 // pred_fallthru
        _
    $region6: #{tpu_custom_call.1} parent=1 // loop_footer
      %s17 = sadd.s32 1, %s13
    $region7: #{tpu_custom_call.1} parent=1 // loop_footer_branch
      %12 = sbr.rel target = $region3
    $region8: #{tpu_custom_call.1} parent=1 // loop_exit
      _
    %446 = vsyncpa [#allocation3], 1
    %s447 = scalar_lea.sflag [#allocation3], 1
    %448 = vsyncpa %s447, 1

</llo_original>
